<compile_context>
chip_gen: v7x
topology: tpu7x:2x2x1
jax: 0.10.0
libtpu: 0.0.40
codegen_flags: <defaults>
</compile_context>

<pallas_src>
import functools

import jax
import jax.numpy as jnp
from jax.experimental import pallas as pl
from jax.experimental.pallas import tpu as pltpu


def _deepset_kernel(xs_ref, ws_ref, wl_ref, bs_ref, o_ref, *, n_set):
    """One grid step: TB whole sets, flattened to a (TB*N, Fin) row slab.

    Fused form of Gamma(x) + Lambda(x - mean_N(x)):
        out = x @ (Wg + Wl) + (bg + bl) - mean_N(x) @ Wl
    """
    x = xs_ref[...]                          # (TB*N, Fin), activation dtype
    rows, fin = x.shape
    tb = rows // n_set

    # Set-mean in f32 regardless of activation dtype (avoids bf16 reduction bias).
    xf = x.astype(jnp.float32).reshape(tb, n_set, fin)
    m = jnp.mean(xf, axis=1)                 # (TB, Fin) f32

    # One dense MXU pass with the fused weight over the whole row slab.
    main = jnp.dot(x, ws_ref[...], preferred_element_type=jnp.float32)   # (TB*N, Fout)
    main = main + bs_ref[...]                # fused bias (f32), 2-D broadcast

    # Rank-"TB" mean correction: ~N-times cheaper than the main matmul.
    corr = jnp.dot(m.astype(wl_ref.dtype), wl_ref[...],
                   preferred_element_type=jnp.float32)                   # (TB, Fout)

    fout = main.shape[-1]
    out = main.reshape(tb, n_set, fout) - corr[:, None, :]
    o_ref[...] = out.reshape(rows, fout).astype(o_ref.dtype)


def _pick_tb(B, N, Fin, Fout, itemsize, vmem_budget=8 * 1024 * 1024):
    """Largest divisor of B such that the grid still has >=2 steps (megacore /
    v7x second TC) and the double-buffered activation blocks stay tiny vs VMEM."""
    best = 1
    for tb in range(1, B + 1):
        if B % tb:
            continue
        if B >= 2 and B // tb < 2:
            continue
        work = 2 * 2 * tb * N * (Fin + Fout) * itemsize   # in+out blocks, double-buffered
        if work > vmem_budget:
            continue
        best = tb
    return best


def deepset_layer(x, w_gamma, b_gamma, w_lambda, b_lambda, *, tb=None):
    """x: (B, N, Fin); w_*: (Fin, Fout) (== W^T of torch Linear); b_*: (1, Fout)
    -> (B, N, Fout).  Implements the pool='mean', normalization='' path."""
    # TODO(synk): the 'max' pool branch in the reference calls x.max(dim=1, keepdim=True),
    #             which returns a (values, indices) tuple and would error in torch;
    #             only the 'mean' path is implemented.  'batchnorm' is also not applied
    #             (module default normalization='').
    B, N, Fin = x.shape
    Fout = w_gamma.shape[1]
    dtype = x.dtype
    itemsize = jnp.dtype(dtype).itemsize

    # Algebraic fusion, precomputed once (not per grid step).
    w_sum = (w_gamma.astype(jnp.float32) + w_lambda.astype(jnp.float32)).astype(dtype)
    b_sum = b_gamma.astype(jnp.float32) + b_lambda.astype(jnp.float32)   # keep bias f32
    w_lam = w_lambda.astype(dtype)

    if tb is None:
        tb = _pick_tb(B, N, Fin, Fout, itemsize)
    assert B % tb == 0
    rows = tb * N
    grid = (B // tb,)

    # Present activations as a 2-D slab: free metadata reshape, makes the kernel
    # blocks plain (rows, F) tiles (sublane-dense matmuls and stores).
    x2 = x.reshape(B * N, Fin)

    flops = 2 * B * N * Fin * Fout + 2 * B * Fin * Fout
    bytes_accessed = (B * N * (Fin + Fout) * itemsize
                      + (w_sum.size + w_lam.size) * itemsize
                      + b_sum.size * 4)

    out2 = pl.pallas_call(
        functools.partial(_deepset_kernel, n_set=N),
        out_shape=jax.ShapeDtypeStruct((B * N, Fout), dtype),
        grid_spec=pltpu.PrefetchScalarGridSpec(
            num_scalar_prefetch=0,
            grid=grid,
            in_specs=[
                pl.BlockSpec((rows, Fin), lambda i: (i, 0)),   # x slab tile
                pl.BlockSpec((Fin, Fout), lambda i: (0, 0)),   # W_sum (resident)
                pl.BlockSpec((Fin, Fout), lambda i: (0, 0)),   # W_lambda (resident)
                pl.BlockSpec((1, Fout), lambda i: (0, 0)),     # b_sum (resident)
            ],
            out_specs=pl.BlockSpec((rows, Fout), lambda i: (i, 0)),
        ),
        compiler_params=pltpu.CompilerParams(
            dimension_semantics=("parallel",)),
        cost_estimate=pl.CostEstimate(
            flops=flops, transcendentals=0, bytes_accessed=bytes_accessed),
    )(x2, w_sum, w_lam, b_sum)

    return out2.reshape(B, N, Fout)


def init_linear(key, in_features, out_features):
    # Mimic torch.nn.Linear default init: U(-1/sqrt(in), 1/sqrt(in)).
    kw, kb = jax.random.split(key)
    bound = 1.0 / jnp.sqrt(jnp.float32(in_features))
    # Stored as (in_features, out_features) == W^T of the PyTorch weight.
    w = jax.random.uniform(kw, (in_features, out_features), jnp.float32,
                           minval=-bound, maxval=bound)
    b = jax.random.uniform(kb, (1, out_features), jnp.float32,
                           minval=-bound, maxval=bound)
    return w, b


def _reference(x, wg, bg, wl, bl):
    return (x @ wg + bg) + ((x - x.mean(axis=1, keepdims=True)) @ wl + bl)


if __name__ == "__main__":
    key = jax.random.PRNGKey(0)

    # ---- Primary run: lane-dense feature dims (Fin = Fout = 128), f32 ----
    B, N, Fin, Fout = 8, 16, 128, 128
    kx, kg, kl = jax.random.split(key, 3)
    x = jax.random.normal(kx, (B, N, Fin), jnp.float32)
    w_gamma, b_gamma = init_linear(kg, Fin, Fout)
    w_lambda, b_lambda = init_linear(kl, Fin, Fout)

    out = jax.block_until_ready(deepset_layer(x, w_gamma, b_gamma, w_lambda, b_lambda))
    ref = _reference(x, w_gamma, b_gamma, w_lambda, b_lambda)
    assert out.shape == (B, N, Fout)
    assert jnp.allclose(out, ref, atol=2e-4, rtol=2e-4)

    # ---- Small / odd feature dims still work (blocks equal the full feature extent) ----
    B2, N2, Fin2, Fout2 = 2, 8, 16, 32
    kx2, kg2, kl2 = jax.random.split(jax.random.PRNGKey(1), 3)
    x2 = jax.random.normal(kx2, (B2, N2, Fin2), jnp.float32)
    wg2, bg2 = init_linear(kg2, Fin2, Fout2)
    wl2, bl2 = init_linear(kl2, Fin2, Fout2)
    out2 = jax.block_until_ready(deepset_layer(x2, wg2, bg2, wl2, bl2))
    ref2 = _reference(x2, wg2, bg2, wl2, bl2)
    assert jnp.allclose(out2, ref2, atol=2e-4, rtol=2e-4)

    # ---- bf16 activations / weights, f32 accumulation inside the kernel ----
    x_bf = x.astype(jnp.bfloat16)
    out_bf = jax.block_until_ready(
        deepset_layer(x_bf, w_gamma, b_gamma, w_lambda, b_lambda))
    ref_bf = _reference(x_bf.astype(jnp.float32),
                        w_gamma.astype(jnp.bfloat16).astype(jnp.float32), b_gamma,
                        w_lambda.astype(jnp.bfloat16).astype(jnp.float32), b_lambda)
    assert out_bf.dtype == jnp.bfloat16
    assert jnp.allclose(out_bf.astype(jnp.float32), ref_bf, atol=5e-2, rtol=5e-2)

    print("KERNEL_OK")
</pallas_src>

<mosaic_0001>
module attributes {stable_mosaic.version = 11 : i64} {
  func.func @_deepset_kernel(%arg0: i32, %arg1: memref<64x128xf32, #tpu.memory_space<vmem>>, %arg2: memref<128x128xf32, #tpu.memory_space<vmem>>, %arg3: memref<128x128xf32, #tpu.memory_space<vmem>>, %arg4: memref<1x128xf32, #tpu.memory_space<vmem>>, %arg5: memref<64x128xf32, #tpu.memory_space<vmem>>) attributes {dimension_semantics = [#tpu.dimension_semantics<parallel>], iteration_bounds = array<i64: 2>, scalar_prefetch = 0 : i64, scratch_operands = 0 : i64, tpu.core_type = #tpu.core_type<tc>, window_params = [{transform_indices = @transform_0, window_bounds = array<i64: 64, 128>}, {pipeline_mode = #tpu.pipeline_mode<synchronous>, transform_indices = @transform_1, window_bounds = array<i64: 128, 128>}, {pipeline_mode = #tpu.pipeline_mode<synchronous>, transform_indices = @transform_2, window_bounds = array<i64: 128, 128>}, {pipeline_mode = #tpu.pipeline_mode<synchronous>, transform_indices = @transform_3, window_bounds = array<i64: 1, 128>}, {transform_indices = @transform_4, window_bounds = array<i64: 64, 128>}]} {
    %c0 = arith.constant 0 : index
    %c0_0 = arith.constant 0 : index
    %0 = vector.load %arg1[%c0, %c0_0] : memref<64x128xf32, #tpu.memory_space<vmem>>, vector<64x128xf32>
    %1 = vector.shape_cast %0 : vector<64x128xf32> to vector<4x16x128xf32>
    %cst = arith.constant dense<0.000000e+00> : vector<4x128xf32>
    %2 = vector.multi_reduction <add>, %1, %cst [1] : vector<4x16x128xf32> to vector<4x128xf32>
    %cst_1 = arith.constant 1.600000e+01 : f32
    %3 = vector.broadcast %cst_1 : f32 to vector<4x128xf32>
    %4 = arith.divf %2, %3 : vector<4x128xf32>
    %c0_2 = arith.constant 0 : index
    %c0_3 = arith.constant 0 : index
    %5 = vector.load %arg2[%c0_2, %c0_3] : memref<128x128xf32, #tpu.memory_space<vmem>>, vector<128x128xf32>
    %cst_4 = arith.constant dense<0.000000e+00> : vector<64x128xf32>
    %6 = tpu.matmul %0, %5, %cst_4 {dimension_numbers = #tpu.dot_dimension_numbers<[1], [0], [0], [1], [0, 0, 1, 1], [], []>} : vector<64x128xf32>, vector<128x128xf32>, vector<64x128xf32> -> vector<64x128xf32>
    %c0_5 = arith.constant 0 : index
    %c0_6 = arith.constant 0 : index
    %7 = vector.load %arg4[%c0_5, %c0_6] : memref<1x128xf32, #tpu.memory_space<vmem>>, vector<1x128xf32>
    %8 = vector.broadcast %7 : vector<1x128xf32> to vector<64x128xf32>
    %9 = arith.addf %6, %8 : vector<64x128xf32>
    %c0_7 = arith.constant 0 : index
    %c0_8 = arith.constant 0 : index
    %10 = vector.load %arg3[%c0_7, %c0_8] : memref<128x128xf32, #tpu.memory_space<vmem>>, vector<128x128xf32>
    %cst_9 = arith.constant dense<0.000000e+00> : vector<4x128xf32>
    %11 = tpu.matmul %4, %10, %cst_9 {dimension_numbers = #tpu.dot_dimension_numbers<[1], [0], [0], [1], [0, 0, 1, 1], [], []>} : vector<4x128xf32>, vector<128x128xf32>, vector<4x128xf32> -> vector<4x128xf32>
    %12 = vector.shape_cast %9 : vector<64x128xf32> to vector<4x16x128xf32>
    %13 = vector.shape_cast %11 : vector<4x128xf32> to vector<4x1x128xf32>
    %14 = vector.broadcast %13 : vector<4x1x128xf32> to vector<4x16x128xf32>
    %15 = arith.subf %12, %14 : vector<4x16x128xf32>
    %16 = vector.shape_cast %15 : vector<4x16x128xf32> to vector<64x128xf32>
    %c0_10 = arith.constant 0 : index
    %c0_11 = arith.constant 0 : index
    %17 = vector.load %arg5[%c0_10, %c0_11] : memref<64x128xf32, #tpu.memory_space<vmem>>, vector<64x128xf32>
    tpu.vector_store %arg5[%c0_10, %c0_11], %16 {strides = array<i32>} : memref<64x128xf32, #tpu.memory_space<vmem>>, vector<64x128xf32>,
    return
  }
  func.func @transform_0(%arg0: i32) -> (i32, i32) {
    %c0_i32 = arith.constant 0 : i32
    %c0_i32_0 = arith.constant 0 : i32
    return %arg0, %c0_i32 : i32, i32
  }
  func.func @transform_1(%arg0: i32) -> (i32, i32) {
    %c0_i32 = arith.constant 0 : i32
    %c0_i32_0 = arith.constant 0 : i32
    %c0_i32_1 = arith.constant 0 : i32
    return %c0_i32, %c0_i32_0 : i32, i32
  }
  func.func @transform_2(%arg0: i32) -> (i32, i32) {
    %c0_i32 = arith.constant 0 : i32
    %c0_i32_0 = arith.constant 0 : i32
    %c0_i32_1 = arith.constant 0 : i32
    return %c0_i32, %c0_i32_0 : i32, i32
  }
  func.func @transform_3(%arg0: i32) -> (i32, i32) {
    %c0_i32 = arith.constant 0 : i32
    %c0_i32_0 = arith.constant 0 : i32
    %c0_i32_1 = arith.constant 0 : i32
    return %c0_i32, %c0_i32_0 : i32, i32
  }
  func.func @transform_4(%arg0: i32) -> (i32, i32) {
    %c0_i32 = arith.constant 0 : i32
    %c0_i32_0 = arith.constant 0 : i32
    return %arg0, %c0_i32 : i32, i32
  }
}

</mosaic_0001>

<llo_original>
// kernel: tpu_custom_call.1
$region0: #{tpu_custom_call.1}
  #allocation0 [shape = 'u32[]', space=smem, size = 0x4, offset = 0x4, fixed_abs, tag = 'smem constant byte address 0x4 - core index']
  #allocation1 [shape = 'u32[144,128]{1,0:T(1,128)}', space=vmem, size = 0x12000, scoped, tag = 'internal scratch']
  %s0 = inlined_call_operand.hbm [shape: f32[128,128], index: 0, kind: input, shape index: {}]
  %s1 = inlined_call_operand.hbm [shape: f32[128,128], index: 1, kind: input, shape index: {}]
  %s2 = inlined_call_operand.hbm [shape: f32[128,128], index: 2, kind: input, shape index: {}]
  %s3 = inlined_call_operand.vmem [shape: f32[1,128], index: 3, kind: input, shape index: {}]
  %s4 = inlined_call_operand.hbm [shape: f32[128,128], index: 4, kind: output, shape index: {}]
  %s5 = sld [smem:[#allocation0]]
  $region61: #{tpu_custom_call.1} parent=0
    _
  %s7 = ssub.s32 1, %s5
  %s8 = scalar_select 0, %s7, %s5
  $region1: #{tpu_custom_call.1} parent=0
    #allocation2 [shape = 'u8[65536]{0}', space=vmem, size = 0x10000, scoped, tag = 'input window, operand 0']
    #allocation3 [shape = 's32[2]{0}', space=sflag, size = 0x8, scoped, tag = 'scoped memory for tpu_custom_call.1']
    #allocation4 [shape = 's32[2]{0}', space=sflag, size = 0x8, scoped, tag = 'scoped memory for tpu_custom_call.1']
    #allocation5 [shape = 'u8[65536]{0}', space=vmem, size = 0x10000, scoped, tag = 'input window, operand 1, single buffered']
    #allocation6 [shape = 's32[1]{0}', space=sflag, size = 0x4, scoped, tag = 'scoped memory for tpu_custom_call.1']
    #allocation7 [shape = 'u8[65536]{0}', space=vmem, size = 0x10000, scoped, tag = 'input window, operand 2, single buffered']
    #allocation8 [shape = 'u8[65536]{0}', space=vmem, size = 0x10000, scoped, tag = 'output window, operand 0']
    %9 = vsyncpa [#allocation3], 0
    %s10 = scalar_lea.sflag [#allocation3], 1
    %11 = vsyncpa %s10, 0
    %12 = vsyncpa [#allocation6], 0
    %13 = vsyncpa [#allocation4], 0
    %s14 = scalar_lea.sflag [#allocation4], 1
    %15 = vsyncpa %s14, 0
    loop: start=0, step=1, limit=4
    $region2: #{tpu_custom_call.1} parent=1 // loop_pre_header
      _
    $region3: #{tpu_custom_call.1} parent=1 // loop_header
      %s17 = sphi 0, %s21
      %p18 = scmp.ge.s32.totalorder %s17, 4
      %s27 = sphi 0, %s29
      %s30 = sphi 0, %s27
      %s31 = sphi 0, %s30
      %s47 = sphi 0, %s31
      %s51 = sphi 0, %s51
      %s53 = sphi 0, %s51
      %s54 = sphi 0, %s53
      %s68 = sphi 0, %s54
      %s72 = sphi 0, %s72
      %s74 = sphi 0, %s72
      %s75 = sphi 0, %s74
      %s89 = sphi 0, %s75
      %s93 = sphi 0, %s93
      %s95 = sphi 0, %s93
      %s96 = sphi 0, %s95
      %s110 = sphi 0, %s96
      %s116 = sphi 0, %s118
      %s119 = sphi 0, %s116
      %s120 = sphi 0, %s119
      %s136 = sphi 0, %s120
    $region4: #{tpu_custom_call.1} parent=1 // loop_header_branch
      %20 = sbr.rel (%p18) target = $region8
    $region5: #{tpu_custom_call.1} parent=1 // loop_body
      %s22 = ssub.s32 %s17, 1
      %s23 = ssub.s32 %s17, 2
      %s24 = sadd.s32 %s17, 1
      %s25 = ssub.s32 %s17, %s24
      %p26 = scmp.eq.s32.totalorder %s25, 0
      %s28 = sadd.s32 %s27, 1
      %s29 = scalar_select %p26, %s27, %s28
      %p32 = pneg %p26
      %p33 = scmp.eq.s32.totalorder %s17, 1
      %p34 = por %p32, %p33
      %p35 = scmp.ne.s32.totalorder %s27, %s30
      %p36 = scmp.eq.s32.totalorder %s17, 0
      %p37 = por %p35, %p36
      %p38 = scmp.ne.s32.totalorder %s27, %s30
      %p39 = scmp.eq.s32.totalorder %s22, 1
      %p40 = por %p38, %p39
      %p41 = scmp.ne.s32.totalorder %s30, %s31
      %p42 = scmp.eq.s32.totalorder %s22, 0
      %p43 = por %p41, %p42
      %p44 = scmp.ne.s32.totalorder %s30, %s31
      %p45 = scmp.eq.s32.totalorder %s23, 1
      %p46 = por %p44, %p45
      %p48 = scmp.ne.s32.totalorder %s31, %s47
      %p49 = scmp.eq.s32.totalorder %s23, 0
      %p50 = por %p48, %p49
      %s52 = sadd.s32 %s51, 1
      %p55 = scmp.eq.s32.totalorder %s17, 1
      %p56 = scmp.ne.s32.totalorder %s51, %s53
      %p57 = scmp.eq.s32.totalorder %s17, 0
      %p58 = por %p56, %p57
      %p59 = scmp.ne.s32.totalorder %s51, %s53
      %p60 = scmp.eq.s32.totalorder %s22, 1
      %p61 = por %p59, %p60
      %p62 = scmp.ne.s32.totalorder %s53, %s54
      %p63 = scmp.eq.s32.totalorder %s22, 0
      %p64 = por %p62, %p63
      %p65 = scmp.ne.s32.totalorder %s53, %s54
      %p66 = scmp.eq.s32.totalorder %s23, 1
      %p67 = por %p65, %p66
      %p69 = scmp.ne.s32.totalorder %s54, %s68
      %p70 = scmp.eq.s32.totalorder %s23, 0
      %p71 = por %p69, %p70
      %s73 = sadd.s32 %s72, 1
      %p76 = scmp.eq.s32.totalorder %s17, 1
      %p77 = scmp.ne.s32.totalorder %s72, %s74
      %p78 = scmp.eq.s32.totalorder %s17, 0
      %p79 = por %p77, %p78
      %p80 = scmp.ne.s32.totalorder %s72, %s74
      %p81 = scmp.eq.s32.totalorder %s22, 1
      %p82 = por %p80, %p81
      %p83 = scmp.ne.s32.totalorder %s74, %s75
      %p84 = scmp.eq.s32.totalorder %s22, 0
      %p85 = por %p83, %p84
      %p86 = scmp.ne.s32.totalorder %s74, %s75
      %p87 = scmp.eq.s32.totalorder %s23, 1
      %p88 = por %p86, %p87
      %p90 = scmp.ne.s32.totalorder %s75, %s89
      %p91 = scmp.eq.s32.totalorder %s23, 0
      %p92 = por %p90, %p91
      %s94 = sadd.s32 %s93, 1
      %p97 = scmp.eq.s32.totalorder %s17, 1
      %p98 = scmp.ne.s32.totalorder %s93, %s95
      %p99 = scmp.eq.s32.totalorder %s17, 0
      %p100 = por %p98, %p99
      %p101 = scmp.ne.s32.totalorder %s93, %s95
      %p102 = scmp.eq.s32.totalorder %s22, 1
      %p103 = por %p101, %p102
      %p104 = scmp.ne.s32.totalorder %s95, %s96
      %p105 = scmp.eq.s32.totalorder %s22, 0
      %p106 = por %p104, %p105
      %p107 = scmp.ne.s32.totalorder %s95, %s96
      %p108 = scmp.eq.s32.totalorder %s23, 1
      %p109 = por %p107, %p108
      %p111 = scmp.ne.s32.totalorder %s96, %s110
      %p112 = scmp.eq.s32.totalorder %s23, 0
      %p113 = por %p111, %p112
      %s114 = ssub.s32 %s17, %s24
      %p115 = scmp.eq.s32.totalorder %s114, 0
      %s117 = sadd.s32 %s116, 1
      %s118 = scalar_select %p115, %s116, %s117
      %p121 = pneg %p115
      %p122 = scmp.eq.s32.totalorder %s17, 1
      %p123 = por %p121, %p122
      %p124 = scmp.ne.s32.totalorder %s116, %s119
      %p125 = scmp.eq.s32.totalorder %s17, 0
      %p126 = por %p124, %p125
      %p127 = scmp.ne.s32.totalorder %s116, %s119
      %p128 = scmp.eq.s32.totalorder %s22, 1
      %p129 = por %p127, %p128
      %p130 = scmp.ne.s32.totalorder %s119, %s120
      %p131 = scmp.eq.s32.totalorder %s22, 0
      %p132 = por %p130, %p131
      %p133 = scmp.ne.s32.totalorder %s119, %s120
      %p134 = scmp.eq.s32.totalorder %s23, 1
      %p135 = por %p133, %p134
      %p137 = scmp.ne.s32.totalorder %s120, %s136
      %p138 = scmp.eq.s32.totalorder %s23, 0
      %p139 = por %p137, %p138
      %p140 = scmp.le.s32.totalorder 1, %s17
      %p141 = scmp.lt.s32.totalorder %s17, 3
      %p142 = pnand %p140, %p141
      %p143 = pneg %p142
      // Predicated region
      $region9: #{tpu_custom_call.1} parent=5 // pred_check
        _
      $region10: #{tpu_custom_call.1} parent=5 // pred_check_branch
        %145 = sbr.rel (%p142) target = $region12
      $region11: #{tpu_custom_call.1} parent=5 // pred_region
        %s146 = ssub.s32 %s17, 1
        // Predicated region
        $region13: #{tpu_custom_call.1} parent=11 // pred_check
          %p147 = pneg %p64
        $region14: #{tpu_custom_call.1} parent=11 // pred_check_branch
          %149 = sbr.rel (%p147) target = $region16
        $region15: #{tpu_custom_call.1} parent=11 // pred_region
          %s151 = ssub.s32 2048, 2048
          %152 = vsyncadd [#allocation6], %s151
          %s153 = sshll.u32 [#allocation5], 4
          %s154 = int_to_ptr.vmem [resolvable:$true] %s153
          %159 = dma.hbm_to_vmem [thread:$0]  %s1, 2048, %s154, [#allocation6], 128, 128, 8
        $region16: #{tpu_custom_call.1} parent=11 // pred_fallthru
          _
        // Predicated region
        $region17: #{tpu_custom_call.1} parent=11 // pred_check
          %p160 = pneg %p85
        $region18: #{tpu_custom_call.1} parent=11 // pred_check_branch
          %162 = sbr.rel (%p160) target = $region20
        $region19: #{tpu_custom_call.1} parent=11 // pred_region
          %s164 = ssub.s32 2048, 2048
          %165 = vsyncadd [#allocation6], %s164
          %s166 = sshll.u32 [#allocation7], 4
          %s167 = int_to_ptr.vmem [resolvable:$true] %s166
          %172 = dma.hbm_to_vmem [thread:$0]  %s2, 2048, %s167, [#allocation6], 128, 128, 8
        $region20: #{tpu_custom_call.1} parent=11 // pred_fallthru
          _
        // Predicated region
        $region21: #{tpu_custom_call.1} parent=11 // pred_check
          %p173 = pneg %p106
        $region22: #{tpu_custom_call.1} parent=11 // pred_check_branch
          %175 = sbr.rel (%p173) target = $region24
        $region23: #{tpu_custom_call.1} parent=11 // pred_region
          _
        $region24: #{tpu_custom_call.1} parent=11 // pred_fallthru
          _
      $region12: #{tpu_custom_call.1} parent=5 // pred_fallthru
        _
      %p176 = scmp.lt.s32.totalorder %s17, 2
      // Predicated region
      $region25: #{tpu_custom_call.1} parent=5 // pred_check
        %p177 = pneg %p176
      $region26: #{tpu_custom_call.1} parent=5 // pred_check_branch
        %179 = sbr.rel (%p177) target = $region28
      $region27: #{tpu_custom_call.1} parent=5 // pred_region
        // Predicated region
        $region29: #{tpu_custom_call.1} parent=27 // pred_check
          %p180 = pneg %p37
        $region30: #{tpu_custom_call.1} parent=27 // pred_check_branch
          %182 = sbr.rel (%p180) target = $region32
        $region31: #{tpu_custom_call.1} parent=27 // pred_region
          %s183 = sand.u32 %s27, 1
          %s184 = scalar_lea.sflag [#allocation3], %s183
          %s185 = sand.u32 %s27, 1
          %s186 = smul.addr %s185, 64
          %s187 = scalar_lea.vmem [#allocation2], %s186
          %s188 = smul.u32 8, %s17
          %s190 = ssub.s32 1024, 1024
          %191 = vsyncadd %s184, %s190
          %s192 = smul.addr %s188, 128
          %s193 = scalar_lea.hbm %s0, %s192
          %s194 = sshll.u32 %s187, 4
          %s195 = int_to_ptr.vmem [resolvable:$true] %s194
          %200 = dma.hbm_to_vmem [thread:$0]  %s193, 1024, %s195, %s184, 128, 128, 8
        $region32: #{tpu_custom_call.1} parent=27 // pred_fallthru
          _
      $region28: #{tpu_custom_call.1} parent=5 // pred_fallthru
        _
      %p201 = scmp.le.s32.totalorder 1, %s17
      %p202 = scmp.lt.s32.totalorder %s17, 3
      %p203 = pnand %p201, %p202
      %p204 = pneg %p203
      // Predicated region
      $region33: #{tpu_custom_call.1} parent=5 // pred_check
        _
      $region34: #{tpu_custom_call.1} parent=5 // pred_check_branch
        %206 = sbr.rel (%p203) target = $region36
      $region35: #{tpu_custom_call.1} parent=5 // pred_region
        %s207 = ssub.s32 %s17, 1
        %s208 = sand.u32 %s30, 1
        %s209 = scalar_lea.sflag [#allocation3], %s208
        %s210 = sand.u32 %s30, 1
        %s211 = smul.addr %s210, 64
        %s212 = scalar_lea.vmem [#allocation2], %s211
        // Predicated region
        $region37: #{tpu_custom_call.1} parent=35 // pred_check
          %p213 = pneg %p43
        $region38: #{tpu_custom_call.1} parent=35 // pred_check_branch
          %215 = sbr.rel (%p213) target = $region40
        $region39: #{tpu_custom_call.1} parent=35 // pred_region
          %216 = dma.done %s209, 1024
        $region40: #{tpu_custom_call.1} parent=35 // pred_fallthru
          _
        // Predicated region
        $region41: #{tpu_custom_call.1} parent=35 // pred_check
          %p217 = pneg %p64
        $region42: #{tpu_custom_call.1} parent=35 // pred_check_branch
          %219 = sbr.rel (%p217) target = $region44
        $region43: #{tpu_custom_call.1} parent=35 // pred_region
          %220 = dma.done [#allocation6], 2048
        $region44: #{tpu_custom_call.1} parent=35 // pred_fallthru
          _
        // Predicated region
        $region45: #{tpu_custom_call.1} parent=35 // pred_check
          %p221 = pneg %p85
        $region46: #{tpu_custom_call.1} parent=35 // pred_check_branch
          %223 = sbr.rel (%p221) target = $region48
        $region47: #{tpu_custom_call.1} parent=35 // pred_region
          %224 = dma.done [#allocation6], 2048
        $region48: #{tpu_custom_call.1} parent=35 // pred_fallthru
          _
        %s225 = sand.u32 %s30, 1
        %s226 = scalar_lea.sflag [#allocation3], %s225
        %s227 = sand.u32 %s30, 1
        %s228 = smul.addr %s227, 64
        %s229 = scalar_lea.vmem [#allocation2], %s228
        %p230 = pneg %p43
        %p231 = pneg %p40
        %p232 = pneg %p64
        %p233 = pneg %p61
        %p234 = pneg %p85
        %p235 = pneg %p82
        %p236 = pneg %p106
        %p237 = pneg %p103
        %p238 = pneg %p132
        %p239 = pneg %p129
        %s240 = sand.u32 %s119, 1
        %s241 = scalar_lea.sflag [#allocation4], %s240
        %s242 = sand.u32 %s119, 1
        %s243 = smul.addr %s242, 64
        %s244 = scalar_lea.vmem [#allocation8], %s243
        %s245 = smul.u32 8, %s22
        %s246 = smul.u32 8, %s22
        %v247 = vld [vmem:[%s212] sm:$0xff]
        %v248 = vld [vmem:[%s212 + $0x8] sm:$0xff]
        %v249 = vld [vmem:[%s212 + $0x10] sm:$0xff]
        %v250 = vld [vmem:[%s212 + $0x18] sm:$0xff]
        %v251 = vld [vmem:[%s212 + $0x20] sm:$0xff]
        %v252 = vld [vmem:[%s212 + $0x28] sm:$0xff]
        %v253 = vld [vmem:[%s212 + $0x30] sm:$0xff]
        %v254 = vld [vmem:[%s212 + $0x38] sm:$0xff]
        %v255 = vadd.f32 %v247, %v248
        %v256 = vrot.slane %v255, 4
        %v257 = vadd.f32 %v255, %v256
        %v258 = vrot.slane %v257, 2
        %v259 = vadd.f32 %v257, %v258
        %v260 = vrot.slane %v259, 1
        %v261 = vadd.f32 %v259, %v260
        %v262 = vadd.f32 %v249, %v250
        %v263 = vrot.slane %v262, 4
        %v264 = vadd.f32 %v262, %v263
        %v265 = vrot.slane %v264, 2
        %v266 = vadd.f32 %v264, %v265
        %v267 = vrot.slane %v266, 1
        %v268 = vadd.f32 %v266, %v267
        %v269 = vadd.f32 %v251, %v252
        %v270 = vrot.slane %v269, 4
        %v271 = vadd.f32 %v269, %v270
        %v272 = vrot.slane %v271, 2
        %v273 = vadd.f32 %v271, %v272
        %v274 = vrot.slane %v273, 1
        %v275 = vadd.f32 %v273, %v274
        %v276 = vadd.f32 %v253, %v254
        %v277 = vrot.slane %v276, 4
        %v278 = vadd.f32 %v276, %v277
        %v279 = vrot.slane %v278, 2
        %v280 = vadd.f32 %v278, %v279
        %v281 = vrot.slane %v280, 1
        %v282 = vadd.f32 %v280, %v281
        %v283 = vrcp.pop 16.0
        %v284 = vmul.f32 %v261, %v283
        %v285 = vmul.f32 %v268, %v283
        %v286 = vmul.f32 %v275, %v283
        %v287 = vmul.f32 %v282, %v283
        %v288 = vld [vmem:[#allocation5] sm:$0xff]
        %v289 = vld [vmem:[#allocation5 + $0x8] sm:$0xff]
        %v290 = vld [vmem:[#allocation5 + $0x10] sm:$0xff]
        %v291 = vld [vmem:[#allocation5 + $0x18] sm:$0xff]
        %v292 = vld [vmem:[#allocation5 + $0x20] sm:$0xff]
        %v293 = vld [vmem:[#allocation5 + $0x28] sm:$0xff]
        %v294 = vld [vmem:[#allocation5 + $0x30] sm:$0xff]
        %v295 = vld [vmem:[#allocation5 + $0x38] sm:$0xff]
        %v296 = vld [vmem:[#allocation5 + $0x40] sm:$0xff]
        %v297 = vld [vmem:[#allocation5 + $0x48] sm:$0xff]
        %v298 = vld [vmem:[#allocation5 + $0x50] sm:$0xff]
        %v299 = vld [vmem:[#allocation5 + $0x58] sm:$0xff]
        %v300 = vld [vmem:[#allocation5 + $0x60] sm:$0xff]
        %v301 = vld [vmem:[#allocation5 + $0x68] sm:$0xff]
        %v302 = vld [vmem:[#allocation5 + $0x70] sm:$0xff]
        %v303 = vld [vmem:[#allocation5 + $0x78] sm:$0xff]
        %v304 = vld [vmem:[%s3] sm:$0x1]
        %v306 = vlaneseq
        %v307 = vshrl.u32 %v306, 7
        %v308 = vsub.s32 0, %v307
        %v309 = vrot.slane %v304, %v308
        %311 = vmatprep.subr.mxu0 0.0
        %312 = vmatpush1.msra.mxu0 %v288
        %313 = vmatprep.subr.mxu0 0.0
        %314 = vmatpush1.msra.mxu0 %v289
        %315 = vmatprep.subr.mxu0 0.0
        %316 = vmatpush1.msra.mxu0 %v290
        %317 = vmatprep.subr.mxu0 0.0
        %318 = vmatpush1.msra.mxu0 %v291
        %319 = vmatprep.subr.mxu0 0.0
        %320 = vmatpush1.msra.mxu0 %v292
        %321 = vmatprep.subr.mxu0 0.0
        %322 = vmatpush1.msra.mxu0 %v293
        %323 = vmatprep.subr.mxu0 0.0
        %324 = vmatpush1.msra.mxu0 %v294
        %325 = vmatprep.subr.mxu0 0.0
        %326 = vmatpush1.msra.mxu0 %v295
        %327 = vmatprep.subr.mxu0 0.0
        %328 = vmatpush1.msra.mxu0 %v296
        %329 = vmatprep.subr.mxu0 0.0
        %330 = vmatpush1.msra.mxu0 %v297
        %331 = vmatprep.subr.mxu0 0.0
        %332 = vmatpush1.msra.mxu0 %v298
        %333 = vmatprep.subr.mxu0 0.0
        %334 = vmatpush1.msra.mxu0 %v299
        %335 = vmatprep.subr.mxu0 0.0
        %336 = vmatpush1.msra.mxu0 %v300
        %337 = vmatprep.subr.mxu0 0.0
        %338 = vmatpush1.msra.mxu0 %v301
        %339 = vmatprep.subr.mxu0 0.0
        %340 = vmatpush1.msra.mxu0 %v302
        %341 = vmatprep.subr.mxu0 0.0
        %342 = vmatpush1.msra.mxu0 %v303
        %343 = vmatprep.subr.mxu0 0.0
        %344 = vmatpush1.msra.mxu0 0.0
        %345 = vmatprep.subr.mxu0 0.0
        %346 = vmatpush1.msra.mxu0 0.0
        %347 = vmatprep.subr.mxu0 0.0
        %348 = vmatpush1.msra.mxu0 0.0
        %349 = vmatprep.subr.mxu0 0.0
        %350 = vmatpush1.msra.mxu0 0.0
        %351 = vmatprep.subr.mxu0 0.0
        %352 = vmatpush1.msra.mxu0 0.0
        %353 = vmatprep.subr.mxu0 0.0
        %354 = vmatpush1.msra.mxu0 0.0
        %355 = vmatprep.subr.mxu0 0.0
        %356 = vmatpush1.msra.mxu0 0.0
        %357 = vmatprep.subr.mxu0 0.0
        %358 = vmatpush1.msra.mxu0 0.0
        %359 = vmatprep.subr.mxu0 0.0
        %360 = vmatpush1.msra.mxu0 0.0
        %361 = vmatprep.subr.mxu0 0.0
        %362 = vmatpush1.msra.mxu0 0.0
        %363 = vmatprep.subr.mxu0 0.0
        %364 = vmatpush1.msra.mxu0 0.0
        %365 = vmatprep.subr.mxu0 0.0
        %366 = vmatpush1.msra.mxu0 0.0
        %367 = vmatprep.subr.mxu0 0.0
        %368 = vmatpush1.msra.mxu0 0.0
        %369 = vmatprep.subr.mxu0 0.0
        %370 = vmatpush1.msra.mxu0 0.0
        %371 = vmatprep.subr.mxu0 0.0
        %372 = vmatpush1.msra.mxu0 0.0
        %373 = vmatprep.subr.mxu0 0.0
        %374 = vmatpush1.msra.mxu0 0.0
        %375 = vmatprep.mubr.f32.mxu0 0.0
        %376 = vmatmul.mubr.f32.gmra.mrb[0].mxu0 %v247
        %v377 = vpop.f32.mrb[0].mxu0
        %v378 = vadd.f32 %v309, %v377
        %v379 = vpop.f32.mrb[0].mxu0
        %380 = vmatprep.mubr.f32.mxu0 0.0
        %381 = vmatmul.mubr.f32.gmra.mrb[0].mxu0 %v248
        %v382 = vpop.f32.mrb[0].mxu0
        %v383 = vadd.f32 %v309, %v382
        %v384 = vpop.f32.mrb[0].mxu0
        %385 = vmatprep.mubr.f32.mxu0 0.0
        %386 = vmatmul.mubr.f32.gmra.mrb[0].mxu0 %v249
        %v387 = vpop.f32.mrb[0].mxu0
        %v388 = vadd.f32 %v309, %v387
        %v389 = vpop.f32.mrb[0].mxu0
        %390 = vmatprep.mubr.f32.mxu0 0.0
        %391 = vmatmul.mubr.f32.gmra.mrb[0].mxu0 %v250
        %v392 = vpop.f32.mrb[0].mxu0
        %v393 = vadd.f32 %v309, %v392
        %v394 = vpop.f32.mrb[0].mxu0
        %395 = vmatprep.mubr.f32.mxu0 0.0
        %396 = vmatmul.mubr.f32.gmra.mrb[0].mxu0 %v251
        %v397 = vpop.f32.mrb[0].mxu0
        %v398 = vadd.f32 %v309, %v397
        %v399 = vpop.f32.mrb[0].mxu0
        %400 = vmatprep.mubr.f32.mxu0 0.0
        %401 = vmatmul.mubr.f32.gmra.mrb[0].mxu0 %v252
        %v402 = vpop.f32.mrb[0].mxu0
        %v403 = vadd.f32 %v309, %v402
        %v404 = vpop.f32.mrb[0].mxu0
        %405 = vmatprep.mubr.f32.mxu0 0.0
        %406 = vmatmul.mubr.f32.gmra.mrb[0].mxu0 %v253
        %v407 = vpop.f32.mrb[0].mxu0
        %v408 = vadd.f32 %v309, %v407
        %v409 = vpop.f32.mrb[0].mxu0
        %410 = vmatprep.mubr.f32.mxu0 0.0
        %411 = vmatmul.mubr.f32.gmra.mrb[0].mxu0 %v254
        %v412 = vpop.f32.mrb[0].mxu0
        %v413 = vadd.f32 %v309, %v412
        %v414 = vpop.f32.mrb[0].mxu0
        %415 = vdwg.mxu0
        %v416 = vld [vmem:[#allocation7] sm:$0xff]
        %v417 = vld [vmem:[#allocation7 + $0x8] sm:$0xff]
        %v418 = vld [vmem:[#allocation7 + $0x10] sm:$0xff]
        %v419 = vld [vmem:[#allocation7 + $0x18] sm:$0xff]
        %v420 = vld [vmem:[#allocation7 + $0x20] sm:$0xff]
        %v421 = vld [vmem:[#allocation7 + $0x28] sm:$0xff]
        %v422 = vld [vmem:[#allocation7 + $0x30] sm:$0xff]
        %v423 = vld [vmem:[#allocation7 + $0x38] sm:$0xff]
        %v424 = vld [vmem:[#allocation7 + $0x40] sm:$0xff]
        %v425 = vld [vmem:[#allocation7 + $0x48] sm:$0xff]
        %v426 = vld [vmem:[#allocation7 + $0x50] sm:$0xff]
        %v427 = vld [vmem:[#allocation7 + $0x58] sm:$0xff]
        %v428 = vld [vmem:[#allocation7 + $0x60] sm:$0xff]
        %v429 = vld [vmem:[#allocation7 + $0x68] sm:$0xff]
        %v430 = vld [vmem:[#allocation7 + $0x70] sm:$0xff]
        %v431 = vld [vmem:[#allocation7 + $0x78] sm:$0xff]
        %vm436 = vcmask 1041409
        %v437 = vsel %vm436, %v285, %v284
        %vm438 = vcmask 1042434
        %v439 = vsel %vm438, %v286, %v437
        %vm440 = vcmask 1043459
        %v441 = vsel %vm440, %v287, %v439
        %443 = vmatprep.subr.mxu0 0.0
        %444 = vmatpush1.msra.mxu0 %v416
        %445 = vmatprep.subr.mxu0 0.0
        %446 = vmatpush1.msra.mxu0 %v417
        %447 = vmatprep.subr.mxu0 0.0
        %448 = vmatpush1.msra.mxu0 %v418
        %449 = vmatprep.subr.mxu0 0.0
        %450 = vmatpush1.msra.mxu0 %v419
        %451 = vmatprep.subr.mxu0 0.0
        %452 = vmatpush1.msra.mxu0 %v420
        %453 = vmatprep.subr.mxu0 0.0
        %454 = vmatpush1.msra.mxu0 %v421
        %455 = vmatprep.subr.mxu0 0.0
        %456 = vmatpush1.msra.mxu0 %v422
        %457 = vmatprep.subr.mxu0 0.0
        %458 = vmatpush1.msra.mxu0 %v423
        %459 = vmatprep.subr.mxu0 0.0
        %460 = vmatpush1.msra.mxu0 %v424
        %461 = vmatprep.subr.mxu0 0.0
        %462 = vmatpush1.msra.mxu0 %v425
        %463 = vmatprep.subr.mxu0 0.0
        %464 = vmatpush1.msra.mxu0 %v426
        %465 = vmatprep.subr.mxu0 0.0
        %466 = vmatpush1.msra.mxu0 %v427
        %467 = vmatprep.subr.mxu0 0.0
        %468 = vmatpush1.msra.mxu0 %v428
        %469 = vmatprep.subr.mxu0 0.0
        %470 = vmatpush1.msra.mxu0 %v429
        %471 = vmatprep.subr.mxu0 0.0
        %472 = vmatpush1.msra.mxu0 %v430
        %473 = vmatprep.subr.mxu0 0.0
        %474 = vmatpush1.msra.mxu0 %v431
        %475 = vmatprep.subr.mxu0 0.0
        %476 = vmatpush1.msra.mxu0 0.0
        %477 = vmatprep.subr.mxu0 0.0
        %478 = vmatpush1.msra.mxu0 0.0
        %479 = vmatprep.subr.mxu0 0.0
        %480 = vmatpush1.msra.mxu0 0.0
        %481 = vmatprep.subr.mxu0 0.0
        %482 = vmatpush1.msra.mxu0 0.0
        %483 = vmatprep.subr.mxu0 0.0
        %484 = vmatpush1.msra.mxu0 0.0
        %485 = vmatprep.subr.mxu0 0.0
        %486 = vmatpush1.msra.mxu0 0.0
        %487 = vmatprep.subr.mxu0 0.0
        %488 = vmatpush1.msra.mxu0 0.0
        %489 = vmatprep.subr.mxu0 0.0
        %490 = vmatpush1.msra.mxu0 0.0
        %491 = vmatprep.subr.mxu0 0.0
        %492 = vmatpush1.msra.mxu0 0.0
        %493 = vmatprep.subr.mxu0 0.0
        %494 = vmatpush1.msra.mxu0 0.0
        %495 = vmatprep.subr.mxu0 0.0
        %496 = vmatpush1.msra.mxu0 0.0
        %497 = vmatprep.subr.mxu0 0.0
        %498 = vmatpush1.msra.mxu0 0.0
        %499 = vmatprep.subr.mxu0 0.0
        %500 = vmatpush1.msra.mxu0 0.0
        %501 = vmatprep.subr.mxu0 0.0
        %502 = vmatpush1.msra.mxu0 0.0
        %503 = vmatprep.subr.mxu0 0.0
        %504 = vmatpush1.msra.mxu0 0.0
        %505 = vmatprep.subr.mxu0 0.0
        %506 = vmatpush1.msra.mxu0 0.0
        %507 = vmatprep.mubr.f32.mxu0 0.0
        %508 = vmatmul.mubr.f32.gmra.mrb[0].mxu0 %v441
        %v509 = vpop.f32.mrb[0].mxu0
        %v510 = vadd.f32 0.0, %v509
        %v511 = vpop.f32.mrb[0].mxu0
        %512 = vdwg.mxu0
        %v515 = vunpack.c.l.s4 1966171168
        %v516 = vunpack.c.0.s8 %v515
        %v517 = vlaneseq
        %v518 = vshrl.u32 %v517, 7
        %v519 = vsub.s32 %v516, %v518
        %v520 = vrot.slane %v510, %v519
        %v521 = vcombine.high %v520, %v520
        %v523 = vunpack.c.l.s4 1966171168
        %v524 = vunpack.c.0.s8 %v523
        %v525 = vlaneseq
        %v526 = vshrl.u32 %v525, 7
        %v527 = vsub.s32 %v524, %v526
        %v528 = vrot.slane %v520, %v527
        %v530 = vunpack.c.l.s4 1966171168
        %v531 = vunpack.c.0.s8 %v530
        %v532 = vlaneseq
        %v533 = vshrl.u32 %v532, 7
        %v534 = vsub.s32 %v531, %v533
        %v535 = vrot.slane %v521, %v534
        %v536 = vcombine.high %v528, %v528
        %v537 = vcombine.high %v535, %v535
        %v538 = vlaneseq
        %v539 = vshrl.u32 %v538, 7
        %v540 = vsub.s32 0, %v539
        %v541 = vrot.slane %v528, %v540
        %v542 = vlaneseq
        %v543 = vshrl.u32 %v542, 7
        %v544 = vsub.s32 0, %v543
        %v545 = vrot.slane %v535, %v544
        %v546 = vlaneseq
        %v547 = vshrl.u32 %v546, 7
        %v548 = vsub.s32 0, %v547
        %v549 = vrot.slane %v536, %v548
        %v550 = vlaneseq
        %v551 = vshrl.u32 %v550, 7
        %v552 = vsub.s32 0, %v551
        %v553 = vrot.slane %v537, %v552
        %v558 = vsub.f32 %v378, %v541
        %v559 = vsub.f32 %v383, %v541
        %v560 = vsub.f32 %v388, %v545
        %v561 = vsub.f32 %v393, %v545
        %v562 = vsub.f32 %v398, %v549
        %v563 = vsub.f32 %v403, %v549
        %v564 = vsub.f32 %v408, %v553
        %v565 = vsub.f32 %v413, %v553
        %566 = vst [vmem:[%s244] sm:$0xff] %v558
        %567 = vst [vmem:[%s244 + $0x8] sm:$0xff] %v559
        %568 = vst [vmem:[%s244 + $0x10] sm:$0xff] %v560
        %569 = vst [vmem:[%s244 + $0x18] sm:$0xff] %v561
        %570 = vst [vmem:[%s244 + $0x20] sm:$0xff] %v562
        %571 = vst [vmem:[%s244 + $0x28] sm:$0xff] %v563
        %572 = vst [vmem:[%s244 + $0x30] sm:$0xff] %v564
        %573 = vst [vmem:[%s244 + $0x38] sm:$0xff] %v565
        %s574 = sand.u32 %s119, 1
        %s575 = scalar_lea.sflag [#allocation4], %s574
        %s576 = sand.u32 %s119, 1
        %s577 = smul.addr %s576, 64
        %s578 = scalar_lea.vmem [#allocation8], %s577
        // Predicated region
        $region49: #{tpu_custom_call.1} parent=35 // pred_check
          %p579 = pneg %p129
        $region50: #{tpu_custom_call.1} parent=35 // pred_check_branch
          %581 = sbr.rel (%p579) target = $region52
        $region51: #{tpu_custom_call.1} parent=35 // pred_region
          %s582 = smul.u32 8, %s22
          %s584 = ssub.s32 1024, 1024
          %585 = vsyncadd %s575, %s584
          %s586 = smul.addr %s582, 128
          %s587 = scalar_lea.hbm %s4, %s586
          %s588 = sshll.u32 %s578, 4
          %s589 = int_to_ptr.vmem [resolvable:$true] %s588
          %594 = dma.vmem_to_hbm [thread:$0]  %s589, 1024, %s587, %s575, 128, 128, 8
        $region52: #{tpu_custom_call.1} parent=35 // pred_fallthru
          _
      $region36: #{tpu_custom_call.1} parent=5 // pred_fallthru
        _
      %p595 = scmp.le.s32.totalorder 2, %s17
      // Predicated region
      $region53: #{tpu_custom_call.1} parent=5 // pred_check
        %p596 = pneg %p595
      $region54: #{tpu_custom_call.1} parent=5 // pred_check_branch
        %598 = sbr.rel (%p596) target = $region56
      $region55: #{tpu_custom_call.1} parent=5 // pred_region
        %s599 = ssub.s32 %s17, 2
        // Predicated region
        $region57: #{tpu_custom_call.1} parent=55 // pred_check
          %p600 = pneg %p135
        $region58: #{tpu_custom_call.1} parent=55 // pred_check_branch
          %602 = sbr.rel (%p600) target = $region60
        $region59: #{tpu_custom_call.1} parent=55 // pred_region
          %s603 = sand.u32 %s120, 1
          %s604 = scalar_lea.sflag [#allocation4], %s603
          %s605 = sand.u32 %s120, 1
          %s606 = smul.addr %s605, 64
          %s607 = scalar_lea.vmem [#allocation8], %s606
          %608 = dma.done %s604, 1024
        $region60: #{tpu_custom_call.1} parent=55 // pred_fallthru
          _
      $region56: #{tpu_custom_call.1} parent=5 // pred_fallthru
        _
    $region6: #{tpu_custom_call.1} parent=1 // loop_footer
      %s21 = sadd.s32 1, %s17
    $region7: #{tpu_custom_call.1} parent=1 // loop_footer_branch
      %16 = sbr.rel target = $region3
    $region8: #{tpu_custom_call.1} parent=1 // loop_exit
      _
    %609 = vsyncpa [#allocation3], 1
    %s610 = scalar_lea.sflag [#allocation3], 1
    %611 = vsyncpa %s610, 1
    %612 = vsyncpa [#allocation6], 1
    %613 = vsyncpa [#allocation4], 1
    %s614 = scalar_lea.sflag [#allocation4], 1
    %615 = vsyncpa %s614, 1

</llo_original>
